<compile_context>
chip_gen: v7x
topology: tpu7x:2x2x1
jax: 0.10.0
libtpu: 0.0.40
codegen_flags: <defaults>
</compile_context>

<pallas_src>
import functools

import jax
import jax.numpy as jnp
from jax.experimental import pallas as pl
from jax.experimental.pallas import tpu as pltpu


def _vmem_config():
    """Generation-aware (vmem_limit_bytes, tile_budget_bytes, min_grid_steps)."""
    cap = None
    try:
        cap = getattr(pltpu.get_tpu_info(), "vmem_capacity_bytes", None)
    except Exception:
        cap = None
    if cap is not None and cap >= 100 * 1024 * 1024:
        # v5e / v6e: 128 MiB VMEM per TensorCore -> big tiles, 4+ grid steps.
        return 96 * 1024 * 1024, 72 * 1024 * 1024, 4
    # v7x (64 MiB / TC) or unknown: conservative scoped limit, and >=8 grid
    # steps so the two TensorCores both stay busy and the masked tail step
    # does not cause large load imbalance.
    return 48 * 1024 * 1024, 36 * 1024 * 1024, 8


def _pick_block_rows(rows, width, itemsize, tile_budget_bytes, min_steps):
    """Largest 8-aligned row tile that fits the VMEM budget, keeping >= min_steps steps."""
    # Per-row VMEM cost: 3 pipelined arrays (X, Y, out) x 2 buffers x itemsize,
    # plus one full-tile float32 temporary (z / zc) inside the kernel body.
    per_row = width * (3 * 2 * itemsize + 4)
    budget_rows = max(8, (tile_budget_bytes // per_row) // 8 * 8)
    block_rows = min(budget_rows, 1024)

    # Keep at least ~min_steps grid steps where the problem is big enough, so
    # the DMA pipeline has work to overlap and megacore sharding is balanced.
    if rows > 8 * min_steps:
        cap = (((rows + min_steps - 1) // min_steps) + 7) // 8 * 8
        block_rows = min(block_rows, max(8, cap))

    # Never larger than the sublane-rounded row count.
    block_rows = min(block_rows, ((rows + 7) // 8) * 8)
    return max(8, block_rows)


def add_norm_kernel(x_ref, y_ref, gamma_ref, beta_ref, o_ref, *, eps, inv_hidden):
    """Direct path: one row per tile-row (hidden is the lane dim)."""
    # z = dropout(Y) + X   (dropout p=0 -> identity)
    # TODO(synk): dropout with p>0 (training mode) would need pltpu.prng_* in-kernel.
    z = x_ref[...].astype(jnp.float32) + y_ref[...].astype(jnp.float32)

    mean = jnp.sum(z, axis=-1, keepdims=True) * inv_hidden        # (rows, 1)
    zc = z - mean                                                  # reused by var & epilogue
    var = jnp.sum(zc * zc, axis=-1, keepdims=True) * inv_hidden   # two-pass biased variance
    inv_std = jax.lax.rsqrt(var + eps)                            # EUP, (rows, 1)

    # Per-row epilogue: no full-tile rank-1 temporaries.
    o_ref[...] = ((zc * inv_std) * gamma_ref[...] + beta_ref[...]).astype(o_ref.dtype)


def add_norm_packed_kernel(x_ref, y_ref, gamma_ref, beta_ref, avg_ref, o_ref, *, eps):
    """Packed path: g = width // hidden rows packed per 128-lane vreg.

    avg_ref is a (width, width) block-diagonal matrix with 1/hidden inside each
    hidden x hidden block, so z @ avg gives the per-segment mean already
    replicated across that segment's lanes (one MXU pass, lane-dense).
    """
    z = x_ref[...].astype(jnp.float32) + y_ref[...].astype(jnp.float32)

    mean = jnp.dot(z, avg_ref[...], preferred_element_type=jnp.float32,
                   precision=jax.lax.Precision.HIGHEST)
    zc = z - mean
    var = jnp.dot(zc * zc, avg_ref[...], preferred_element_type=jnp.float32,
                  precision=jax.lax.Precision.HIGHEST)
    inv_std = jax.lax.rsqrt(var + eps)

    o_ref[...] = ((zc * inv_std) * gamma_ref[...] + beta_ref[...]).astype(o_ref.dtype)


def add_norm(x, y, gamma, beta, eps=1e-12, block_rows=None):
    """AddNorm forward: LayerNorm(dropout(Y) + X) over the last axis (dropout p=0)."""
    assert x.shape == y.shape
    orig_shape = x.shape
    hidden = orig_shape[-1]
    rows = 1
    for d in orig_shape[:-1]:
        rows *= d

    vmem_limit, tile_budget, min_steps = _vmem_config()

    # Lane-density: pack g rows per 128-lane vreg when hidden is tiny.
    g = 128 // hidden if (hidden < 128 and 128 % hidden == 0) else 1
    if g > 1 and rows % g != 0:
        g = 1  # TODO(synk): pad rows to a multiple of g instead of falling back.
    width = hidden * g
    rows_p = rows // g

    x2 = x.reshape(rows_p, width)
    y2 = y.reshape(rows_p, width)
    # Pre-cast params once here; the same VMEM block is re-used every grid step.
    gamma_f = gamma.astype(jnp.float32).reshape(1, hidden)
    beta_f = beta.astype(jnp.float32).reshape(1, hidden)

    if block_rows is None:
        block_rows = _pick_block_rows(rows_p, width, x2.dtype.itemsize,
                                      tile_budget, min_steps)

    grid = (pl.cdiv(rows_p, block_rows),)  # tail block handled by Pallas masking
    tile_spec = pl.BlockSpec((block_rows, width), lambda i: (i, 0))
    param_spec = pl.BlockSpec((1, width), lambda i: (0, 0))
    compiler_params = pltpu.CompilerParams(
        dimension_semantics=("parallel",),
        vmem_limit_bytes=vmem_limit,
    )

    if g == 1:
        kernel = functools.partial(add_norm_kernel, eps=float(eps),
                                   inv_hidden=1.0 / float(hidden))
        out2 = pl.pallas_call(
            kernel,
            out_shape=jax.ShapeDtypeStruct((rows_p, width), x.dtype),
            grid_spec=pltpu.PrefetchScalarGridSpec(
                num_scalar_prefetch=0,
                grid=grid,
                in_specs=[tile_spec, tile_spec, param_spec, param_spec],
                out_specs=tile_spec,
            ),
            compiler_params=compiler_params,
        )(x2, y2, gamma_f, beta_f)
    else:
        gamma_t = jnp.tile(gamma_f, (1, g))   # (1, width)
        beta_t = jnp.tile(beta_f, (1, g))     # (1, width)
        seg = jnp.arange(width, dtype=jnp.int32) // hidden
        avg = (seg[:, None] == seg[None, :]).astype(jnp.float32) * (1.0 / float(hidden))

        kernel = functools.partial(add_norm_packed_kernel, eps=float(eps))
        out2 = pl.pallas_call(
            kernel,
            out_shape=jax.ShapeDtypeStruct((rows_p, width), x.dtype),
            grid_spec=pltpu.PrefetchScalarGridSpec(
                num_scalar_prefetch=0,
                grid=grid,
                in_specs=[tile_spec, tile_spec, param_spec, param_spec,
                          pl.BlockSpec((width, width), lambda i: (0, 0))],
                out_specs=tile_spec,
            ),
            compiler_params=compiler_params,
        )(x2, y2, gamma_t, beta_t, avg)

    return out2.reshape(orig_shape)


def _reference(x, y, gamma, beta, eps):
    z = y + x
    mean = jnp.mean(z, axis=-1, keepdims=True)
    var = jnp.mean((z - mean) ** 2, axis=-1, keepdims=True)
    return gamma * ((z - mean) / jnp.sqrt(var + eps)) + beta


if __name__ == "__main__":
    eps = 1e-12
    key = jax.random.PRNGKey(0)

    # --- Demo shape from the module spec (tiny hidden -> packed lane-dense path) ---
    batch, seq, hidden = 2, 8, 32
    kx, ky, kg, kb = jax.random.split(key, 4)
    x = jax.random.normal(kx, (batch, seq, hidden), dtype=jnp.float32)
    y = jax.random.normal(ky, (batch, seq, hidden), dtype=jnp.float32)
    # nn.Parameter(torch.ones(hidden)) / nn.Parameter(torch.zeros(hidden))
    gamma = jnp.ones((hidden,), dtype=jnp.float32)
    beta = jnp.zeros((hidden,), dtype=jnp.float32)

    out = add_norm(x, y, gamma, beta, eps=eps)
    out = jax.block_until_ready(out)
    ref = _reference(x, y, gamma, beta, eps)
    assert jnp.allclose(out, ref, atol=2e-5, rtol=2e-5), "mismatch vs reference (packed path)"

    # --- Production-like shape (hidden % 128 == 0 -> direct lane-dense path) ---
    hidden2 = 128
    x2 = jax.random.normal(kx, (batch, seq, hidden2), dtype=jnp.float32)
    y2 = jax.random.normal(ky, (batch, seq, hidden2), dtype=jnp.float32)
    gamma2 = jax.random.normal(kg, (hidden2,), dtype=jnp.float32)
    beta2 = jax.random.normal(kb, (hidden2,), dtype=jnp.float32)

    out2 = add_norm(x2, y2, gamma2, beta2, eps=eps)
    out2 = jax.block_until_ready(out2)
    ref2 = _reference(x2, y2, gamma2, beta2, eps)
    assert jnp.allclose(out2, ref2, atol=2e-5, rtol=2e-5), "mismatch vs reference (direct path)"

    print("KERNEL_OK")
</pallas_src>

<mosaic_0001>
module attributes {stable_mosaic.version = 11 : i64} {
  func.func @add_norm_packed_kernel(%arg0: i32, %arg1: memref<8x128xf32, #tpu.memory_space<vmem>>, %arg2: memref<8x128xf32, #tpu.memory_space<vmem>>, %arg3: memref<1x128xf32, #tpu.memory_space<vmem>>, %arg4: memref<1x128xf32, #tpu.memory_space<vmem>>, %arg5: memref<128x128xf32, #tpu.memory_space<vmem>>, %arg6: memref<8x128xf32, #tpu.memory_space<vmem>>) attributes {dimension_semantics = [#tpu.dimension_semantics<parallel>], iteration_bounds = array<i64: 1>, scalar_prefetch = 0 : i64, scratch_operands = 0 : i64, tpu.core_type = #tpu.core_type<tc>, window_params = [{transform_indices = @transform_0, window_bounds = array<i64: 8, 128>}, {transform_indices = @transform_1, window_bounds = array<i64: 8, 128>}, {pipeline_mode = #tpu.pipeline_mode<synchronous>, transform_indices = @transform_2, window_bounds = array<i64: 1, 128>}, {pipeline_mode = #tpu.pipeline_mode<synchronous>, transform_indices = @transform_3, window_bounds = array<i64: 1, 128>}, {pipeline_mode = #tpu.pipeline_mode<synchronous>, transform_indices = @transform_4, window_bounds = array<i64: 128, 128>}, {transform_indices = @transform_5, window_bounds = array<i64: 8, 128>}]} {
    %c0 = arith.constant 0 : index
    %c0_0 = arith.constant 0 : index
    %0 = vector.load %arg1[%c0, %c0_0] : memref<8x128xf32, #tpu.memory_space<vmem>>, vector<8x128xf32>
    %c0_1 = arith.constant 0 : index
    %c0_2 = arith.constant 0 : index
    %1 = vector.load %arg2[%c0_1, %c0_2] : memref<8x128xf32, #tpu.memory_space<vmem>>, vector<8x128xf32>
    %2 = arith.addf %0, %1 : vector<8x128xf32>
    %c0_3 = arith.constant 0 : index
    %c0_4 = arith.constant 0 : index
    %3 = vector.load %arg5[%c0_3, %c0_4] : memref<128x128xf32, #tpu.memory_space<vmem>>, vector<128x128xf32>
    %cst = arith.constant dense<0.000000e+00> : vector<8x128xf32>
    %4 = tpu.matmul %2, %3, %cst {dimension_numbers = #tpu.dot_dimension_numbers<[1], [0], [0], [1], [0, 0, 1, 1], [], []>, precision = #tpu.contract_precision<fp32>} : vector<8x128xf32>, vector<128x128xf32>, vector<8x128xf32> -> vector<8x128xf32>
    %5 = arith.subf %2, %4 : vector<8x128xf32>
    %6 = arith.mulf %5, %5 : vector<8x128xf32>
    %c0_5 = arith.constant 0 : index
    %c0_6 = arith.constant 0 : index
    %7 = vector.load %arg5[%c0_5, %c0_6] : memref<128x128xf32, #tpu.memory_space<vmem>>, vector<128x128xf32>
    %cst_7 = arith.constant dense<0.000000e+00> : vector<8x128xf32>
    %8 = tpu.matmul %6, %7, %cst_7 {dimension_numbers = #tpu.dot_dimension_numbers<[1], [0], [0], [1], [0, 0, 1, 1], [], []>, precision = #tpu.contract_precision<fp32>} : vector<8x128xf32>, vector<128x128xf32>, vector<8x128xf32> -> vector<8x128xf32>
    %cst_8 = arith.constant 9.99999996E-13 : f32
    %9 = vector.broadcast %cst_8 : f32 to vector<8x128xf32>
    %10 = arith.addf %8, %9 : vector<8x128xf32>
    %11 = math.rsqrt %10 : vector<8x128xf32>
    %12 = arith.mulf %5, %11 : vector<8x128xf32>
    %c0_9 = arith.constant 0 : index
    %c0_10 = arith.constant 0 : index
    %13 = vector.load %arg3[%c0_9, %c0_10] : memref<1x128xf32, #tpu.memory_space<vmem>>, vector<1x128xf32>
    %14 = vector.broadcast %13 : vector<1x128xf32> to vector<8x128xf32>
    %15 = arith.mulf %12, %14 : vector<8x128xf32>
    %c0_11 = arith.constant 0 : index
    %c0_12 = arith.constant 0 : index
    %16 = vector.load %arg4[%c0_11, %c0_12] : memref<1x128xf32, #tpu.memory_space<vmem>>, vector<1x128xf32>
    %17 = vector.broadcast %16 : vector<1x128xf32> to vector<8x128xf32>
    %18 = arith.addf %15, %17 : vector<8x128xf32>
    %c0_13 = arith.constant 0 : index
    %c0_14 = arith.constant 0 : index
    %19 = vector.load %arg6[%c0_13, %c0_14] : memref<8x128xf32, #tpu.memory_space<vmem>>, vector<8x128xf32>
    tpu.vector_store %arg6[%c0_13, %c0_14], %18 {strides = array<i32>} : memref<8x128xf32, #tpu.memory_space<vmem>>, vector<8x128xf32>,
    return
  }
  func.func @transform_0(%arg0: i32) -> (i32, i32) {
    %c0_i32 = arith.constant 0 : i32
    %c0_i32_0 = arith.constant 0 : i32
    return %arg0, %c0_i32 : i32, i32
  }
  func.func @transform_1(%arg0: i32) -> (i32, i32) {
    %c0_i32 = arith.constant 0 : i32
    %c0_i32_0 = arith.constant 0 : i32
    return %arg0, %c0_i32 : i32, i32
  }
  func.func @transform_2(%arg0: i32) -> (i32, i32) {
    %c0_i32 = arith.constant 0 : i32
    %c0_i32_0 = arith.constant 0 : i32
    %c0_i32_1 = arith.constant 0 : i32
    return %c0_i32, %c0_i32_0 : i32, i32
  }
  func.func @transform_3(%arg0: i32) -> (i32, i32) {
    %c0_i32 = arith.constant 0 : i32
    %c0_i32_0 = arith.constant 0 : i32
    %c0_i32_1 = arith.constant 0 : i32
    return %c0_i32, %c0_i32_0 : i32, i32
  }
  func.func @transform_4(%arg0: i32) -> (i32, i32) {
    %c0_i32 = arith.constant 0 : i32
    %c0_i32_0 = arith.constant 0 : i32
    %c0_i32_1 = arith.constant 0 : i32
    return %c0_i32, %c0_i32_0 : i32, i32
  }
  func.func @transform_5(%arg0: i32) -> (i32, i32) {
    %c0_i32 = arith.constant 0 : i32
    %c0_i32_0 = arith.constant 0 : i32
    return %arg0, %c0_i32 : i32, i32
  }
}

</mosaic_0001>

<llo_original>
// kernel: tpu_custom_call.1
$region0: #{tpu_custom_call.1}
  #allocation0 [shape = 'u32[]', space=smem, size = 0x4, offset = 0x4, fixed_abs, tag = 'smem constant byte address 0x4 - core index']
  #allocation1 [shape = 'u32[144,128]{1,0:T(1,128)}', space=vmem, size = 0x12000, scoped, tag = 'internal scratch']
  %s0 = inlined_call_operand.hbm [shape: f32[4,128], index: 0, kind: input, shape index: {}]
  %s1 = inlined_call_operand.hbm [shape: f32[4,128], index: 1, kind: input, shape index: {}]
  %s2 = inlined_call_operand.vmem [shape: f32[1,128], index: 2, kind: input, shape index: {}]
  %s3 = inlined_call_operand.vmem [shape: f32[1,128], index: 3, kind: input, shape index: {}]
  %s4 = inlined_call_operand.hbm [shape: f32[128,128], index: 4, kind: input, shape index: {}]
  %s5 = inlined_call_operand.hbm [shape: f32[4,128], index: 5, kind: output, shape index: {}]
  %s6 = sld [smem:[#allocation0]]
  $region42: #{tpu_custom_call.1} parent=0
    _
  %s8 = ssub.s32 1, %s6
  %s9 = scalar_select 0, %s8, %s6
  $region1: #{tpu_custom_call.1} parent=0
    #allocation2 [shape = 'u8[4096]{0}', space=vmem, size = 0x1000, scoped, tag = 'input window, operand 0, single buffered']
    #allocation3 [shape = 's32[1]{0}', space=sflag, size = 0x4, scoped, tag = 'scoped memory for tpu_custom_call.1']
    #allocation4 [shape = 's32[1]{0}', space=sflag, size = 0x4, scoped, tag = 'scoped memory for tpu_custom_call.1']
    #allocation5 [shape = 'u8[4096]{0}', space=vmem, size = 0x1000, scoped, tag = 'input window, operand 1, single buffered']
    #allocation6 [shape = 's32[1]{0}', space=sflag, size = 0x4, scoped, tag = 'scoped memory for tpu_custom_call.1']
    #allocation7 [shape = 'u8[65536]{0}', space=vmem, size = 0x10000, scoped, tag = 'input window, operand 4, single buffered']
    #allocation8 [shape = 'u8[4096]{0}', space=vmem, size = 0x1000, scoped, tag = 'output window, operand 0, single buffered']
    %10 = vsyncpa [#allocation3], 0
    %11 = vsyncpa [#allocation6], 0
    %12 = vsyncpa [#allocation4], 0
    // Predicated region
    $region2: #{tpu_custom_call.1} parent=1 // pred_check
      _
    $region3: #{tpu_custom_call.1} parent=1 // pred_check_branch
      %14 = sbr.rel (0) target = $region5
    $region4: #{tpu_custom_call.1} parent=1 // pred_region
      %s16 = ssub.s32 128, 64
      %17 = vsyncadd [#allocation3], %s16
      %s18 = sshll.u32 [#allocation2], 4
      %s19 = int_to_ptr.vmem [resolvable:$true] %s18
      %24 = dma.hbm_to_vmem [thread:$0]  %s0, 64, %s19, [#allocation3], 64, 64, 4
    $region5: #{tpu_custom_call.1} parent=1 // pred_fallthru
      _
    // Predicated region
    $region6: #{tpu_custom_call.1} parent=1 // pred_check
      _
    $region7: #{tpu_custom_call.1} parent=1 // pred_check_branch
      %26 = sbr.rel (0) target = $region9
    $region8: #{tpu_custom_call.1} parent=1 // pred_region
      %s28 = ssub.s32 128, 64
      %29 = vsyncadd [#allocation6], %s28
      %s30 = sshll.u32 [#allocation5], 4
      %s31 = int_to_ptr.vmem [resolvable:$true] %s30
      %36 = dma.hbm_to_vmem [thread:$0]  %s1, 64, %s31, [#allocation6], 64, 64, 4
    $region9: #{tpu_custom_call.1} parent=1 // pred_fallthru
      _
    // Predicated region
    $region10: #{tpu_custom_call.1} parent=1 // pred_check
      _
    $region11: #{tpu_custom_call.1} parent=1 // pred_check_branch
      %38 = sbr.rel (0) target = $region13
    $region12: #{tpu_custom_call.1} parent=1 // pred_region
      _
    $region13: #{tpu_custom_call.1} parent=1 // pred_fallthru
      _
    // Predicated region
    $region14: #{tpu_custom_call.1} parent=1 // pred_check
      _
    $region15: #{tpu_custom_call.1} parent=1 // pred_check_branch
      %40 = sbr.rel (0) target = $region17
    $region16: #{tpu_custom_call.1} parent=1 // pred_region
      _
    $region17: #{tpu_custom_call.1} parent=1 // pred_fallthru
      _
    // Predicated region
    $region18: #{tpu_custom_call.1} parent=1 // pred_check
      _
    $region19: #{tpu_custom_call.1} parent=1 // pred_check_branch
      %42 = sbr.rel (0) target = $region21
    $region20: #{tpu_custom_call.1} parent=1 // pred_region
      %s44 = ssub.s32 2048, 2048
      %45 = vsyncadd [#allocation6], %s44
      %s46 = sshll.u32 [#allocation7], 4
      %s47 = int_to_ptr.vmem [resolvable:$true] %s46
      %52 = dma.hbm_to_vmem [thread:$0]  %s4, 2048, %s47, [#allocation6], 128, 128, 8
    $region21: #{tpu_custom_call.1} parent=1 // pred_fallthru
      _
    // Predicated region
    $region22: #{tpu_custom_call.1} parent=1 // pred_check
      _
    $region23: #{tpu_custom_call.1} parent=1 // pred_check_branch
      %54 = sbr.rel (0) target = $region25
    $region24: #{tpu_custom_call.1} parent=1 // pred_region
      %55 = dma.done [#allocation3], 128
    $region25: #{tpu_custom_call.1} parent=1 // pred_fallthru
      _
    // Predicated region
    $region26: #{tpu_custom_call.1} parent=1 // pred_check
      _
    $region27: #{tpu_custom_call.1} parent=1 // pred_check_branch
      %57 = sbr.rel (0) target = $region29
    $region28: #{tpu_custom_call.1} parent=1 // pred_region
      %58 = dma.done [#allocation6], 128
    $region29: #{tpu_custom_call.1} parent=1 // pred_fallthru
      _
    // Predicated region
    $region30: #{tpu_custom_call.1} parent=1 // pred_check
      _
    $region31: #{tpu_custom_call.1} parent=1 // pred_check_branch
      %60 = sbr.rel (0) target = $region33
    $region32: #{tpu_custom_call.1} parent=1 // pred_region
      %61 = dma.done [#allocation6], 2048
    $region33: #{tpu_custom_call.1} parent=1 // pred_fallthru
      _
    %v62 = vld [vmem:[#allocation2] sm:$0xff]
    %v63 = vld [vmem:[#allocation5] sm:$0xff]
    %v64 = vadd.f32 %v62, %v63
    %v65 = vld [vmem:[#allocation7] sm:$0xff]
    %v66 = vld [vmem:[#allocation7 + $0x8] sm:$0xff]
    %v67 = vld [vmem:[#allocation7 + $0x10] sm:$0xff]
    %v68 = vld [vmem:[#allocation7 + $0x18] sm:$0xff]
    %v69 = vld [vmem:[#allocation7 + $0x20] sm:$0xff]
    %v70 = vld [vmem:[#allocation7 + $0x28] sm:$0xff]
    %v71 = vld [vmem:[#allocation7 + $0x30] sm:$0xff]
    %v72 = vld [vmem:[#allocation7 + $0x38] sm:$0xff]
    %v73 = vld [vmem:[#allocation7 + $0x40] sm:$0xff]
    %v74 = vld [vmem:[#allocation7 + $0x48] sm:$0xff]
    %v75 = vld [vmem:[#allocation7 + $0x50] sm:$0xff]
    %v76 = vld [vmem:[#allocation7 + $0x58] sm:$0xff]
    %v77 = vld [vmem:[#allocation7 + $0x60] sm:$0xff]
    %v78 = vld [vmem:[#allocation7 + $0x68] sm:$0xff]
    %v79 = vld [vmem:[#allocation7 + $0x70] sm:$0xff]
    %v80 = vld [vmem:[#allocation7 + $0x78] sm:$0xff]
    %81 = vmatprep.subr.mxu0 0.0
    %v82 = vand.u32 %v65, 4294901760
    %83 = vmatpush1.msra.mxu0 %v82
    %84 = vmatprep.subr.mxu0 0.0
    %v85 = vand.u32 %v66, 4294901760
    %86 = vmatpush1.msra.mxu0 %v85
    %87 = vmatprep.subr.mxu0 0.0
    %v88 = vand.u32 %v67, 4294901760
    %89 = vmatpush1.msra.mxu0 %v88
    %90 = vmatprep.subr.mxu0 0.0
    %v91 = vand.u32 %v68, 4294901760
    %92 = vmatpush1.msra.mxu0 %v91
    %93 = vmatprep.subr.mxu0 0.0
    %v94 = vand.u32 %v69, 4294901760
    %95 = vmatpush1.msra.mxu0 %v94
    %96 = vmatprep.subr.mxu0 0.0
    %v97 = vand.u32 %v70, 4294901760
    %98 = vmatpush1.msra.mxu0 %v97
    %99 = vmatprep.subr.mxu0 0.0
    %v100 = vand.u32 %v71, 4294901760
    %101 = vmatpush1.msra.mxu0 %v100
    %102 = vmatprep.subr.mxu0 0.0
    %v103 = vand.u32 %v72, 4294901760
    %104 = vmatpush1.msra.mxu0 %v103
    %105 = vmatprep.subr.mxu0 0.0
    %v106 = vand.u32 %v73, 4294901760
    %107 = vmatpush1.msra.mxu0 %v106
    %108 = vmatprep.subr.mxu0 0.0
    %v109 = vand.u32 %v74, 4294901760
    %110 = vmatpush1.msra.mxu0 %v109
    %111 = vmatprep.subr.mxu0 0.0
    %v112 = vand.u32 %v75, 4294901760
    %113 = vmatpush1.msra.mxu0 %v112
    %114 = vmatprep.subr.mxu0 0.0
    %v115 = vand.u32 %v76, 4294901760
    %116 = vmatpush1.msra.mxu0 %v115
    %117 = vmatprep.subr.mxu0 0.0
    %v118 = vand.u32 %v77, 4294901760
    %119 = vmatpush1.msra.mxu0 %v118
    %120 = vmatprep.subr.mxu0 0.0
    %v121 = vand.u32 %v78, 4294901760
    %122 = vmatpush1.msra.mxu0 %v121
    %123 = vmatprep.subr.mxu0 0.0
    %v124 = vand.u32 %v79, 4294901760
    %125 = vmatpush1.msra.mxu0 %v124
    %126 = vmatprep.subr.mxu0 0.0
    %v127 = vand.u32 %v80, 4294901760
    %128 = vmatpush1.msra.mxu0 %v127
    %129 = vmatprep.subr.mxu0 0.0
    %130 = vmatpush1.msra.mxu0 0.0
    %131 = vmatprep.subr.mxu0 0.0
    %132 = vmatpush1.msra.mxu0 0.0
    %133 = vmatprep.subr.mxu0 0.0
    %134 = vmatpush1.msra.mxu0 0.0
    %135 = vmatprep.subr.mxu0 0.0
    %136 = vmatpush1.msra.mxu0 0.0
    %137 = vmatprep.subr.mxu0 0.0
    %138 = vmatpush1.msra.mxu0 0.0
    %139 = vmatprep.subr.mxu0 0.0
    %140 = vmatpush1.msra.mxu0 0.0
    %141 = vmatprep.subr.mxu0 0.0
    %142 = vmatpush1.msra.mxu0 0.0
    %143 = vmatprep.subr.mxu0 0.0
    %144 = vmatpush1.msra.mxu0 0.0
    %145 = vmatprep.subr.mxu0 0.0
    %146 = vmatpush1.msra.mxu0 0.0
    %147 = vmatprep.subr.mxu0 0.0
    %148 = vmatpush1.msra.mxu0 0.0
    %149 = vmatprep.subr.mxu0 0.0
    %150 = vmatpush1.msra.mxu0 0.0
    %151 = vmatprep.subr.mxu0 0.0
    %152 = vmatpush1.msra.mxu0 0.0
    %153 = vmatprep.subr.mxu0 0.0
    %154 = vmatpush1.msra.mxu0 0.0
    %155 = vmatprep.subr.mxu0 0.0
    %156 = vmatpush1.msra.mxu0 0.0
    %157 = vmatprep.subr.mxu0 0.0
    %158 = vmatpush1.msra.mxu0 0.0
    %159 = vmatprep.subr.mxu0 0.0
    %160 = vmatpush1.msra.mxu0 0.0
    %161 = vmatprep.mubr.f32.mxu0 0.0
    %v162 = vand.u32 %v64, 4294901760
    %v163 = vsub.f32 %v64, %v162
    %v164 = vand.u32 %v163, 4294901760
    %v165 = vsub.f32 %v163, %v164
    %v166 = vand.u32 %v165, 4294901760
    %167 = vmatmul.mubr.f32.gmra.mrb[0].mxu0 %v166
    %v168 = vpop.f32.mrb[0].mxu0
    %v169 = vadd.f32 0.0, %v168
    %v170 = vpop.f32.mrb[0].mxu0
    %171 = vdwg.mxu0
    %172 = vmatprep.subr.mxu0 0.0
    %v173 = vand.u32 %v65, 4294901760
    %v174 = vsub.f32 %v65, %v173
    %v175 = vand.u32 %v174, 4294901760
    %v176 = vsub.f32 %v174, %v175
    %v177 = vand.u32 %v176, 4294901760
    %178 = vmatpush1.msra.mxu0 %v177
    %179 = vmatprep.subr.mxu0 0.0
    %v180 = vand.u32 %v66, 4294901760
    %v181 = vsub.f32 %v66, %v180
    %v182 = vand.u32 %v181, 4294901760
    %v183 = vsub.f32 %v181, %v182
    %v184 = vand.u32 %v183, 4294901760
    %185 = vmatpush1.msra.mxu0 %v184
    %186 = vmatprep.subr.mxu0 0.0
    %v187 = vand.u32 %v67, 4294901760
    %v188 = vsub.f32 %v67, %v187
    %v189 = vand.u32 %v188, 4294901760
    %v190 = vsub.f32 %v188, %v189
    %v191 = vand.u32 %v190, 4294901760
    %192 = vmatpush1.msra.mxu0 %v191
    %193 = vmatprep.subr.mxu0 0.0
    %v194 = vand.u32 %v68, 4294901760
    %v195 = vsub.f32 %v68, %v194
    %v196 = vand.u32 %v195, 4294901760
    %v197 = vsub.f32 %v195, %v196
    %v198 = vand.u32 %v197, 4294901760
    %199 = vmatpush1.msra.mxu0 %v198
    %200 = vmatprep.subr.mxu0 0.0
    %v201 = vand.u32 %v69, 4294901760
    %v202 = vsub.f32 %v69, %v201
    %v203 = vand.u32 %v202, 4294901760
    %v204 = vsub.f32 %v202, %v203
    %v205 = vand.u32 %v204, 4294901760
    %206 = vmatpush1.msra.mxu0 %v205
    %207 = vmatprep.subr.mxu0 0.0
    %v208 = vand.u32 %v70, 4294901760
    %v209 = vsub.f32 %v70, %v208
    %v210 = vand.u32 %v209, 4294901760
    %v211 = vsub.f32 %v209, %v210
    %v212 = vand.u32 %v211, 4294901760
    %213 = vmatpush1.msra.mxu0 %v212
    %214 = vmatprep.subr.mxu0 0.0
    %v215 = vand.u32 %v71, 4294901760
    %v216 = vsub.f32 %v71, %v215
    %v217 = vand.u32 %v216, 4294901760
    %v218 = vsub.f32 %v216, %v217
    %v219 = vand.u32 %v218, 4294901760
    %220 = vmatpush1.msra.mxu0 %v219
    %221 = vmatprep.subr.mxu0 0.0
    %v222 = vand.u32 %v72, 4294901760
    %v223 = vsub.f32 %v72, %v222
    %v224 = vand.u32 %v223, 4294901760
    %v225 = vsub.f32 %v223, %v224
    %v226 = vand.u32 %v225, 4294901760
    %227 = vmatpush1.msra.mxu0 %v226
    %228 = vmatprep.subr.mxu0 0.0
    %v229 = vand.u32 %v73, 4294901760
    %v230 = vsub.f32 %v73, %v229
    %v231 = vand.u32 %v230, 4294901760
    %v232 = vsub.f32 %v230, %v231
    %v233 = vand.u32 %v232, 4294901760
    %234 = vmatpush1.msra.mxu0 %v233
    %235 = vmatprep.subr.mxu0 0.0
    %v236 = vand.u32 %v74, 4294901760
    %v237 = vsub.f32 %v74, %v236
    %v238 = vand.u32 %v237, 4294901760
    %v239 = vsub.f32 %v237, %v238
    %v240 = vand.u32 %v239, 4294901760
    %241 = vmatpush1.msra.mxu0 %v240
    %242 = vmatprep.subr.mxu0 0.0
    %v243 = vand.u32 %v75, 4294901760
    %v244 = vsub.f32 %v75, %v243
    %v245 = vand.u32 %v244, 4294901760
    %v246 = vsub.f32 %v244, %v245
    %v247 = vand.u32 %v246, 4294901760
    %248 = vmatpush1.msra.mxu0 %v247
    %249 = vmatprep.subr.mxu0 0.0
    %v250 = vand.u32 %v76, 4294901760
    %v251 = vsub.f32 %v76, %v250
    %v252 = vand.u32 %v251, 4294901760
    %v253 = vsub.f32 %v251, %v252
    %v254 = vand.u32 %v253, 4294901760
    %255 = vmatpush1.msra.mxu0 %v254
    %256 = vmatprep.subr.mxu0 0.0
    %v257 = vand.u32 %v77, 4294901760
    %v258 = vsub.f32 %v77, %v257
    %v259 = vand.u32 %v258, 4294901760
    %v260 = vsub.f32 %v258, %v259
    %v261 = vand.u32 %v260, 4294901760
    %262 = vmatpush1.msra.mxu0 %v261
    %263 = vmatprep.subr.mxu0 0.0
    %v264 = vand.u32 %v78, 4294901760
    %v265 = vsub.f32 %v78, %v264
    %v266 = vand.u32 %v265, 4294901760
    %v267 = vsub.f32 %v265, %v266
    %v268 = vand.u32 %v267, 4294901760
    %269 = vmatpush1.msra.mxu0 %v268
    %270 = vmatprep.subr.mxu0 0.0
    %v271 = vand.u32 %v79, 4294901760
    %v272 = vsub.f32 %v79, %v271
    %v273 = vand.u32 %v272, 4294901760
    %v274 = vsub.f32 %v272, %v273
    %v275 = vand.u32 %v274, 4294901760
    %276 = vmatpush1.msra.mxu0 %v275
    %277 = vmatprep.subr.mxu0 0.0
    %v278 = vand.u32 %v80, 4294901760
    %v279 = vsub.f32 %v80, %v278
    %v280 = vand.u32 %v279, 4294901760
    %v281 = vsub.f32 %v279, %v280
    %v282 = vand.u32 %v281, 4294901760
    %283 = vmatpush1.msra.mxu0 %v282
    %284 = vmatprep.subr.mxu0 0.0
    %285 = vmatpush1.msra.mxu0 0.0
    %286 = vmatprep.subr.mxu0 0.0
    %287 = vmatpush1.msra.mxu0 0.0
    %288 = vmatprep.subr.mxu0 0.0
    %289 = vmatpush1.msra.mxu0 0.0
    %290 = vmatprep.subr.mxu0 0.0
    %291 = vmatpush1.msra.mxu0 0.0
    %292 = vmatprep.subr.mxu0 0.0
    %293 = vmatpush1.msra.mxu0 0.0
    %294 = vmatprep.subr.mxu0 0.0
    %295 = vmatpush1.msra.mxu0 0.0
    %296 = vmatprep.subr.mxu0 0.0
    %297 = vmatpush1.msra.mxu0 0.0
    %298 = vmatprep.subr.mxu0 0.0
    %299 = vmatpush1.msra.mxu0 0.0
    %300 = vmatprep.subr.mxu0 0.0
    %301 = vmatpush1.msra.mxu0 0.0
    %302 = vmatprep.subr.mxu0 0.0
    %303 = vmatpush1.msra.mxu0 0.0
    %304 = vmatprep.subr.mxu0 0.0
    %305 = vmatpush1.msra.mxu0 0.0
    %306 = vmatprep.subr.mxu0 0.0
    %307 = vmatpush1.msra.mxu0 0.0
    %308 = vmatprep.subr.mxu0 0.0
    %309 = vmatpush1.msra.mxu0 0.0
    %310 = vmatprep.subr.mxu0 0.0
    %311 = vmatpush1.msra.mxu0 0.0
    %312 = vmatprep.subr.mxu0 0.0
    %313 = vmatpush1.msra.mxu0 0.0
    %314 = vmatprep.subr.mxu0 0.0
    %315 = vmatpush1.msra.mxu0 0.0
    %316 = vmatprep.mubr.f32.mxu0 0.0
    %v317 = vand.u32 %v64, 4294901760
    %318 = vmatmul.mubr.f32.gmra.mrb[0].mxu0 %v317
    %v319 = vpop.f32.mrb[0].mxu0
    %v320 = vadd.f32 %v169, %v319
    %v321 = vpop.f32.mrb[0].mxu0
    %322 = vdwg.mxu0
    %323 = vmatprep.subr.mxu0 0.0
    %v324 = vand.u32 %v65, 4294901760
    %v325 = vsub.f32 %v65, %v324
    %326 = vmatpush1.msra.mxu0 %v325
    %327 = vmatprep.subr.mxu0 0.0
    %v328 = vand.u32 %v66, 4294901760
    %v329 = vsub.f32 %v66, %v328
    %330 = vmatpush1.msra.mxu0 %v329
    %331 = vmatprep.subr.mxu0 0.0
    %v332 = vand.u32 %v67, 4294901760
    %v333 = vsub.f32 %v67, %v332
    %334 = vmatpush1.msra.mxu0 %v333
    %335 = vmatprep.subr.mxu0 0.0
    %v336 = vand.u32 %v68, 4294901760
    %v337 = vsub.f32 %v68, %v336
    %338 = vmatpush1.msra.mxu0 %v337
    %339 = vmatprep.subr.mxu0 0.0
    %v340 = vand.u32 %v69, 4294901760
    %v341 = vsub.f32 %v69, %v340
    %342 = vmatpush1.msra.mxu0 %v341
    %343 = vmatprep.subr.mxu0 0.0
    %v344 = vand.u32 %v70, 4294901760
    %v345 = vsub.f32 %v70, %v344
    %346 = vmatpush1.msra.mxu0 %v345
    %347 = vmatprep.subr.mxu0 0.0
    %v348 = vand.u32 %v71, 4294901760
    %v349 = vsub.f32 %v71, %v348
    %350 = vmatpush1.msra.mxu0 %v349
    %351 = vmatprep.subr.mxu0 0.0
    %v352 = vand.u32 %v72, 4294901760
    %v353 = vsub.f32 %v72, %v352
    %354 = vmatpush1.msra.mxu0 %v353
    %355 = vmatprep.subr.mxu0 0.0
    %v356 = vand.u32 %v73, 4294901760
    %v357 = vsub.f32 %v73, %v356
    %358 = vmatpush1.msra.mxu0 %v357
    %359 = vmatprep.subr.mxu0 0.0
    %v360 = vand.u32 %v74, 4294901760
    %v361 = vsub.f32 %v74, %v360
    %362 = vmatpush1.msra.mxu0 %v361
    %363 = vmatprep.subr.mxu0 0.0
    %v364 = vand.u32 %v75, 4294901760
    %v365 = vsub.f32 %v75, %v364
    %366 = vmatpush1.msra.mxu0 %v365
    %367 = vmatprep.subr.mxu0 0.0
    %v368 = vand.u32 %v76, 4294901760
    %v369 = vsub.f32 %v76, %v368
    %370 = vmatpush1.msra.mxu0 %v369
    %371 = vmatprep.subr.mxu0 0.0
    %v372 = vand.u32 %v77, 4294901760
    %v373 = vsub.f32 %v77, %v372
    %374 = vmatpush1.msra.mxu0 %v373
    %375 = vmatprep.subr.mxu0 0.0
    %v376 = vand.u32 %v78, 4294901760
    %v377 = vsub.f32 %v78, %v376
    %378 = vmatpush1.msra.mxu0 %v377
    %379 = vmatprep.subr.mxu0 0.0
    %v380 = vand.u32 %v79, 4294901760
    %v381 = vsub.f32 %v79, %v380
    %382 = vmatpush1.msra.mxu0 %v381
    %383 = vmatprep.subr.mxu0 0.0
    %v384 = vand.u32 %v80, 4294901760
    %v385 = vsub.f32 %v80, %v384
    %386 = vmatpush1.msra.mxu0 %v385
    %387 = vmatprep.subr.mxu0 0.0
    %388 = vmatpush1.msra.mxu0 0.0
    %389 = vmatprep.subr.mxu0 0.0
    %390 = vmatpush1.msra.mxu0 0.0
    %391 = vmatprep.subr.mxu0 0.0
    %392 = vmatpush1.msra.mxu0 0.0
    %393 = vmatprep.subr.mxu0 0.0
    %394 = vmatpush1.msra.mxu0 0.0
    %395 = vmatprep.subr.mxu0 0.0
    %396 = vmatpush1.msra.mxu0 0.0
    %397 = vmatprep.subr.mxu0 0.0
    %398 = vmatpush1.msra.mxu0 0.0
    %399 = vmatprep.subr.mxu0 0.0
    %400 = vmatpush1.msra.mxu0 0.0
    %401 = vmatprep.subr.mxu0 0.0
    %402 = vmatpush1.msra.mxu0 0.0
    %403 = vmatprep.subr.mxu0 0.0
    %404 = vmatpush1.msra.mxu0 0.0
    %405 = vmatprep.subr.mxu0 0.0
    %406 = vmatpush1.msra.mxu0 0.0
    %407 = vmatprep.subr.mxu0 0.0
    %408 = vmatpush1.msra.mxu0 0.0
    %409 = vmatprep.subr.mxu0 0.0
    %410 = vmatpush1.msra.mxu0 0.0
    %411 = vmatprep.subr.mxu0 0.0
    %412 = vmatpush1.msra.mxu0 0.0
    %413 = vmatprep.subr.mxu0 0.0
    %414 = vmatpush1.msra.mxu0 0.0
    %415 = vmatprep.subr.mxu0 0.0
    %416 = vmatpush1.msra.mxu0 0.0
    %417 = vmatprep.subr.mxu0 0.0
    %418 = vmatpush1.msra.mxu0 0.0
    %419 = vmatprep.mubr.f32.mxu0 0.0
    %v420 = vand.u32 %v64, 4294901760
    %v421 = vsub.f32 %v64, %v420
    %422 = vmatmul.mubr.f32.gmra.mrb[0].mxu0 %v421
    %v423 = vpop.f32.mrb[0].mxu0
    %v424 = vadd.f32 %v320, %v423
    %v425 = vpop.f32.mrb[0].mxu0
    %426 = vdwg.mxu0
    %427 = vmatprep.subr.mxu0 0.0
    %v428 = vand.u32 %v65, 4294901760
    %429 = vmatpush1.msra.mxu0 %v428
    %430 = vmatprep.subr.mxu0 0.0
    %v431 = vand.u32 %v66, 4294901760
    %432 = vmatpush1.msra.mxu0 %v431
    %433 = vmatprep.subr.mxu0 0.0
    %v434 = vand.u32 %v67, 4294901760
    %435 = vmatpush1.msra.mxu0 %v434
    %436 = vmatprep.subr.mxu0 0.0
    %v437 = vand.u32 %v68, 4294901760
    %438 = vmatpush1.msra.mxu0 %v437
    %439 = vmatprep.subr.mxu0 0.0
    %v440 = vand.u32 %v69, 4294901760
    %441 = vmatpush1.msra.mxu0 %v440
    %442 = vmatprep.subr.mxu0 0.0
    %v443 = vand.u32 %v70, 4294901760
    %444 = vmatpush1.msra.mxu0 %v443
    %445 = vmatprep.subr.mxu0 0.0
    %v446 = vand.u32 %v71, 4294901760
    %447 = vmatpush1.msra.mxu0 %v446
    %448 = vmatprep.subr.mxu0 0.0
    %v449 = vand.u32 %v72, 4294901760
    %450 = vmatpush1.msra.mxu0 %v449
    %451 = vmatprep.subr.mxu0 0.0
    %v452 = vand.u32 %v73, 4294901760
    %453 = vmatpush1.msra.mxu0 %v452
    %454 = vmatprep.subr.mxu0 0.0
    %v455 = vand.u32 %v74, 4294901760
    %456 = vmatpush1.msra.mxu0 %v455
    %457 = vmatprep.subr.mxu0 0.0
    %v458 = vand.u32 %v75, 4294901760
    %459 = vmatpush1.msra.mxu0 %v458
    %460 = vmatprep.subr.mxu0 0.0
    %v461 = vand.u32 %v76, 4294901760
    %462 = vmatpush1.msra.mxu0 %v461
    %463 = vmatprep.subr.mxu0 0.0
    %v464 = vand.u32 %v77, 4294901760
    %465 = vmatpush1.msra.mxu0 %v464
    %466 = vmatprep.subr.mxu0 0.0
    %v467 = vand.u32 %v78, 4294901760
    %468 = vmatpush1.msra.mxu0 %v467
    %469 = vmatprep.subr.mxu0 0.0
    %v470 = vand.u32 %v79, 4294901760
    %471 = vmatpush1.msra.mxu0 %v470
    %472 = vmatprep.subr.mxu0 0.0
    %v473 = vand.u32 %v80, 4294901760
    %474 = vmatpush1.msra.mxu0 %v473
    %475 = vmatprep.subr.mxu0 0.0
    %476 = vmatpush1.msra.mxu0 0.0
    %477 = vmatprep.subr.mxu0 0.0
    %478 = vmatpush1.msra.mxu0 0.0
    %479 = vmatprep.subr.mxu0 0.0
    %480 = vmatpush1.msra.mxu0 0.0
    %481 = vmatprep.subr.mxu0 0.0
    %482 = vmatpush1.msra.mxu0 0.0
    %483 = vmatprep.subr.mxu0 0.0
    %484 = vmatpush1.msra.mxu0 0.0
    %485 = vmatprep.subr.mxu0 0.0
    %486 = vmatpush1.msra.mxu0 0.0
    %487 = vmatprep.subr.mxu0 0.0
    %488 = vmatpush1.msra.mxu0 0.0
    %489 = vmatprep.subr.mxu0 0.0
    %490 = vmatpush1.msra.mxu0 0.0
    %491 = vmatprep.subr.mxu0 0.0
    %492 = vmatpush1.msra.mxu0 0.0
    %493 = vmatprep.subr.mxu0 0.0
    %494 = vmatpush1.msra.mxu0 0.0
    %495 = vmatprep.subr.mxu0 0.0
    %496 = vmatpush1.msra.mxu0 0.0
    %497 = vmatprep.subr.mxu0 0.0
    %498 = vmatpush1.msra.mxu0 0.0
    %499 = vmatprep.subr.mxu0 0.0
    %500 = vmatpush1.msra.mxu0 0.0
    %501 = vmatprep.subr.mxu0 0.0
    %502 = vmatpush1.msra.mxu0 0.0
    %503 = vmatprep.subr.mxu0 0.0
    %504 = vmatpush1.msra.mxu0 0.0
    %505 = vmatprep.subr.mxu0 0.0
    %506 = vmatpush1.msra.mxu0 0.0
    %507 = vmatprep.mubr.f32.mxu0 0.0
    %v508 = vand.u32 %v64, 4294901760
    %v509 = vsub.f32 %v64, %v508
    %v510 = vand.u32 %v509, 4294901760
    %511 = vmatmul.mubr.f32.gmra.mrb[0].mxu0 %v510
    %v512 = vpop.f32.mrb[0].mxu0
    %v513 = vadd.f32 %v424, %v512
    %v514 = vpop.f32.mrb[0].mxu0
    %515 = vdwg.mxu0
    %516 = vmatprep.subr.mxu0 0.0
    %v517 = vand.u32 %v65, 4294901760
    %v518 = vsub.f32 %v65, %v517
    %v519 = vand.u32 %v518, 4294901760
    %520 = vmatpush1.msra.mxu0 %v519
    %521 = vmatprep.subr.mxu0 0.0
    %v522 = vand.u32 %v66, 4294901760
    %v523 = vsub.f32 %v66, %v522
    %v524 = vand.u32 %v523, 4294901760
    %525 = vmatpush1.msra.mxu0 %v524
    %526 = vmatprep.subr.mxu0 0.0
    %v527 = vand.u32 %v67, 4294901760
    %v528 = vsub.f32 %v67, %v527
    %v529 = vand.u32 %v528, 4294901760
    %530 = vmatpush1.msra.mxu0 %v529
    %531 = vmatprep.subr.mxu0 0.0
    %v532 = vand.u32 %v68, 4294901760
    %v533 = vsub.f32 %v68, %v532
    %v534 = vand.u32 %v533, 4294901760
    %535 = vmatpush1.msra.mxu0 %v534
    %536 = vmatprep.subr.mxu0 0.0
    %v537 = vand.u32 %v69, 4294901760
    %v538 = vsub.f32 %v69, %v537
    %v539 = vand.u32 %v538, 4294901760
    %540 = vmatpush1.msra.mxu0 %v539
    %541 = vmatprep.subr.mxu0 0.0
    %v542 = vand.u32 %v70, 4294901760
    %v543 = vsub.f32 %v70, %v542
    %v544 = vand.u32 %v543, 4294901760
    %545 = vmatpush1.msra.mxu0 %v544
    %546 = vmatprep.subr.mxu0 0.0
    %v547 = vand.u32 %v71, 4294901760
    %v548 = vsub.f32 %v71, %v547
    %v549 = vand.u32 %v548, 4294901760
    %550 = vmatpush1.msra.mxu0 %v549
    %551 = vmatprep.subr.mxu0 0.0
    %v552 = vand.u32 %v72, 4294901760
    %v553 = vsub.f32 %v72, %v552
    %v554 = vand.u32 %v553, 4294901760
    %555 = vmatpush1.msra.mxu0 %v554
    %556 = vmatprep.subr.mxu0 0.0
    %v557 = vand.u32 %v73, 4294901760
    %v558 = vsub.f32 %v73, %v557
    %v559 = vand.u32 %v558, 4294901760
    %560 = vmatpush1.msra.mxu0 %v559
    %561 = vmatprep.subr.mxu0 0.0
    %v562 = vand.u32 %v74, 4294901760
    %v563 = vsub.f32 %v74, %v562
    %v564 = vand.u32 %v563, 4294901760
    %565 = vmatpush1.msra.mxu0 %v564
    %566 = vmatprep.subr.mxu0 0.0
    %v567 = vand.u32 %v75, 4294901760
    %v568 = vsub.f32 %v75, %v567
    %v569 = vand.u32 %v568, 4294901760
    %570 = vmatpush1.msra.mxu0 %v569
    %571 = vmatprep.subr.mxu0 0.0
    %v572 = vand.u32 %v76, 4294901760
    %v573 = vsub.f32 %v76, %v572
    %v574 = vand.u32 %v573, 4294901760
    %575 = vmatpush1.msra.mxu0 %v574
    %576 = vmatprep.subr.mxu0 0.0
    %v577 = vand.u32 %v77, 4294901760
    %v578 = vsub.f32 %v77, %v577
    %v579 = vand.u32 %v578, 4294901760
    %580 = vmatpush1.msra.mxu0 %v579
    %581 = vmatprep.subr.mxu0 0.0
    %v582 = vand.u32 %v78, 4294901760
    %v583 = vsub.f32 %v78, %v582
    %v584 = vand.u32 %v583, 4294901760
    %585 = vmatpush1.msra.mxu0 %v584
    %586 = vmatprep.subr.mxu0 0.0
    %v587 = vand.u32 %v79, 4294901760
    %v588 = vsub.f32 %v79, %v587
    %v589 = vand.u32 %v588, 4294901760
    %590 = vmatpush1.msra.mxu0 %v589
    %591 = vmatprep.subr.mxu0 0.0
    %v592 = vand.u32 %v80, 4294901760
    %v593 = vsub.f32 %v80, %v592
    %v594 = vand.u32 %v593, 4294901760
    %595 = vmatpush1.msra.mxu0 %v594
    %596 = vmatprep.subr.mxu0 0.0
    %597 = vmatpush1.msra.mxu0 0.0
    %598 = vmatprep.subr.mxu0 0.0
    %599 = vmatpush1.msra.mxu0 0.0
    %600 = vmatprep.subr.mxu0 0.0
    %601 = vmatpush1.msra.mxu0 0.0
    %602 = vmatprep.subr.mxu0 0.0
    %603 = vmatpush1.msra.mxu0 0.0
    %604 = vmatprep.subr.mxu0 0.0
    %605 = vmatpush1.msra.mxu0 0.0
    %606 = vmatprep.subr.mxu0 0.0
    %607 = vmatpush1.msra.mxu0 0.0
    %608 = vmatprep.subr.mxu0 0.0
    %609 = vmatpush1.msra.mxu0 0.0
    %610 = vmatprep.subr.mxu0 0.0
    %611 = vmatpush1.msra.mxu0 0.0
    %612 = vmatprep.subr.mxu0 0.0
    %613 = vmatpush1.msra.mxu0 0.0
    %614 = vmatprep.subr.mxu0 0.0
    %615 = vmatpush1.msra.mxu0 0.0
    %616 = vmatprep.subr.mxu0 0.0
    %617 = vmatpush1.msra.mxu0 0.0
    %618 = vmatprep.subr.mxu0 0.0
    %619 = vmatpush1.msra.mxu0 0.0
    %620 = vmatprep.subr.mxu0 0.0
    %621 = vmatpush1.msra.mxu0 0.0
    %622 = vmatprep.subr.mxu0 0.0
    %623 = vmatpush1.msra.mxu0 0.0
    %624 = vmatprep.subr.mxu0 0.0
    %625 = vmatpush1.msra.mxu0 0.0
    %626 = vmatprep.subr.mxu0 0.0
    %627 = vmatpush1.msra.mxu0 0.0
    %628 = vmatprep.mubr.f32.mxu0 0.0
    %v629 = vand.u32 %v64, 4294901760
    %630 = vmatmul.mubr.f32.gmra.mrb[0].mxu0 %v629
    %v631 = vpop.f32.mrb[0].mxu0
    %v632 = vadd.f32 %v513, %v631
    %v633 = vpop.f32.mrb[0].mxu0
    %634 = vdwg.mxu0
    %635 = vmatprep.subr.mxu0 0.0
    %v636 = vand.u32 %v65, 4294901760
    %637 = vmatpush1.msra.mxu0 %v636
    %638 = vmatprep.subr.mxu0 0.0
    %v639 = vand.u32 %v66, 4294901760
    %640 = vmatpush1.msra.mxu0 %v639
    %641 = vmatprep.subr.mxu0 0.0
    %v642 = vand.u32 %v67, 4294901760
    %643 = vmatpush1.msra.mxu0 %v642
    %644 = vmatprep.subr.mxu0 0.0
    %v645 = vand.u32 %v68, 4294901760
    %646 = vmatpush1.msra.mxu0 %v645
    %647 = vmatprep.subr.mxu0 0.0
    %v648 = vand.u32 %v69, 4294901760
    %649 = vmatpush1.msra.mxu0 %v648
    %650 = vmatprep.subr.mxu0 0.0
    %v651 = vand.u32 %v70, 4294901760
    %652 = vmatpush1.msra.mxu0 %v651
    %653 = vmatprep.subr.mxu0 0.0
    %v654 = vand.u32 %v71, 4294901760
    %655 = vmatpush1.msra.mxu0 %v654
    %656 = vmatprep.subr.mxu0 0.0
    %v657 = vand.u32 %v72, 4294901760
    %658 = vmatpush1.msra.mxu0 %v657
    %659 = vmatprep.subr.mxu0 0.0
    %v660 = vand.u32 %v73, 4294901760
    %661 = vmatpush1.msra.mxu0 %v660
    %662 = vmatprep.subr.mxu0 0.0
    %v663 = vand.u32 %v74, 4294901760
    %664 = vmatpush1.msra.mxu0 %v663
    %665 = vmatprep.subr.mxu0 0.0
    %v666 = vand.u32 %v75, 4294901760
    %667 = vmatpush1.msra.mxu0 %v666
    %668 = vmatprep.subr.mxu0 0.0
    %v669 = vand.u32 %v76, 4294901760
    %670 = vmatpush1.msra.mxu0 %v669
    %671 = vmatprep.subr.mxu0 0.0
    %v672 = vand.u32 %v77, 4294901760
    %673 = vmatpush1.msra.mxu0 %v672
    %674 = vmatprep.subr.mxu0 0.0
    %v675 = vand.u32 %v78, 4294901760
    %676 = vmatpush1.msra.mxu0 %v675
    %677 = vmatprep.subr.mxu0 0.0
    %v678 = vand.u32 %v79, 4294901760
    %679 = vmatpush1.msra.mxu0 %v678
    %680 = vmatprep.subr.mxu0 0.0
    %v681 = vand.u32 %v80, 4294901760
    %682 = vmatpush1.msra.mxu0 %v681
    %683 = vmatprep.subr.mxu0 0.0
    %684 = vmatpush1.msra.mxu0 0.0
    %685 = vmatprep.subr.mxu0 0.0
    %686 = vmatpush1.msra.mxu0 0.0
    %687 = vmatprep.subr.mxu0 0.0
    %688 = vmatpush1.msra.mxu0 0.0
    %689 = vmatprep.subr.mxu0 0.0
    %690 = vmatpush1.msra.mxu0 0.0
    %691 = vmatprep.subr.mxu0 0.0
    %692 = vmatpush1.msra.mxu0 0.0
    %693 = vmatprep.subr.mxu0 0.0
    %694 = vmatpush1.msra.mxu0 0.0
    %695 = vmatprep.subr.mxu0 0.0
    %696 = vmatpush1.msra.mxu0 0.0
    %697 = vmatprep.subr.mxu0 0.0
    %698 = vmatpush1.msra.mxu0 0.0
    %699 = vmatprep.subr.mxu0 0.0
    %700 = vmatpush1.msra.mxu0 0.0
    %701 = vmatprep.subr.mxu0 0.0
    %702 = vmatpush1.msra.mxu0 0.0
    %703 = vmatprep.subr.mxu0 0.0
    %704 = vmatpush1.msra.mxu0 0.0
    %705 = vmatprep.subr.mxu0 0.0
    %706 = vmatpush1.msra.mxu0 0.0
    %707 = vmatprep.subr.mxu0 0.0
    %708 = vmatpush1.msra.mxu0 0.0
    %709 = vmatprep.subr.mxu0 0.0
    %710 = vmatpush1.msra.mxu0 0.0
    %711 = vmatprep.subr.mxu0 0.0
    %712 = vmatpush1.msra.mxu0 0.0
    %713 = vmatprep.subr.mxu0 0.0
    %714 = vmatpush1.msra.mxu0 0.0
    %715 = vmatprep.mubr.f32.mxu0 0.0
    %v716 = vand.u32 %v64, 4294901760
    %717 = vmatmul.mubr.f32.gmra.mrb[0].mxu0 %v716
    %v718 = vpop.f32.mrb[0].mxu0
    %v719 = vadd.f32 %v632, %v718
    %v720 = vpop.f32.mrb[0].mxu0
    %721 = vdwg.mxu0
    %v722 = vsub.f32 %v64, %v719
    %v723 = vmul.f32 %v722, %v722
    %724 = vmatprep.subr.mxu0 0.0
    %v725 = vand.u32 %v65, 4294901760
    %726 = vmatpush1.msra.mxu0 %v725
    %727 = vmatprep.subr.mxu0 0.0
    %v728 = vand.u32 %v66, 4294901760
    %729 = vmatpush1.msra.mxu0 %v728
    %730 = vmatprep.subr.mxu0 0.0
    %v731 = vand.u32 %v67, 4294901760
    %732 = vmatpush1.msra.mxu0 %v731
    %733 = vmatprep.subr.mxu0 0.0
    %v734 = vand.u32 %v68, 4294901760
    %735 = vmatpush1.msra.mxu0 %v734
    %736 = vmatprep.subr.mxu0 0.0
    %v737 = vand.u32 %v69, 4294901760
    %738 = vmatpush1.msra.mxu0 %v737
    %739 = vmatprep.subr.mxu0 0.0
    %v740 = vand.u32 %v70, 4294901760
    %741 = vmatpush1.msra.mxu0 %v740
    %742 = vmatprep.subr.mxu0 0.0
    %v743 = vand.u32 %v71, 4294901760
    %744 = vmatpush1.msra.mxu0 %v743
    %745 = vmatprep.subr.mxu0 0.0
    %v746 = vand.u32 %v72, 4294901760
    %747 = vmatpush1.msra.mxu0 %v746
    %748 = vmatprep.subr.mxu0 0.0
    %v749 = vand.u32 %v73, 4294901760
    %750 = vmatpush1.msra.mxu0 %v749
    %751 = vmatprep.subr.mxu0 0.0
    %v752 = vand.u32 %v74, 4294901760
    %753 = vmatpush1.msra.mxu0 %v752
    %754 = vmatprep.subr.mxu0 0.0
    %v755 = vand.u32 %v75, 4294901760
    %756 = vmatpush1.msra.mxu0 %v755
    %757 = vmatprep.subr.mxu0 0.0
    %v758 = vand.u32 %v76, 4294901760
    %759 = vmatpush1.msra.mxu0 %v758
    %760 = vmatprep.subr.mxu0 0.0
    %v761 = vand.u32 %v77, 4294901760
    %762 = vmatpush1.msra.mxu0 %v761
    %763 = vmatprep.subr.mxu0 0.0
    %v764 = vand.u32 %v78, 4294901760
    %765 = vmatpush1.msra.mxu0 %v764
    %766 = vmatprep.subr.mxu0 0.0
    %v767 = vand.u32 %v79, 4294901760
    %768 = vmatpush1.msra.mxu0 %v767
    %769 = vmatprep.subr.mxu0 0.0
    %v770 = vand.u32 %v80, 4294901760
    %771 = vmatpush1.msra.mxu0 %v770
    %772 = vmatprep.subr.mxu0 0.0
    %773 = vmatpush1.msra.mxu0 0.0
    %774 = vmatprep.subr.mxu0 0.0
    %775 = vmatpush1.msra.mxu0 0.0
    %776 = vmatprep.subr.mxu0 0.0
    %777 = vmatpush1.msra.mxu0 0.0
    %778 = vmatprep.subr.mxu0 0.0
    %779 = vmatpush1.msra.mxu0 0.0
    %780 = vmatprep.subr.mxu0 0.0
    %781 = vmatpush1.msra.mxu0 0.0
    %782 = vmatprep.subr.mxu0 0.0
    %783 = vmatpush1.msra.mxu0 0.0
    %784 = vmatprep.subr.mxu0 0.0
    %785 = vmatpush1.msra.mxu0 0.0
    %786 = vmatprep.subr.mxu0 0.0
    %787 = vmatpush1.msra.mxu0 0.0
    %788 = vmatprep.subr.mxu0 0.0
    %789 = vmatpush1.msra.mxu0 0.0
    %790 = vmatprep.subr.mxu0 0.0
    %791 = vmatpush1.msra.mxu0 0.0
    %792 = vmatprep.subr.mxu0 0.0
    %793 = vmatpush1.msra.mxu0 0.0
    %794 = vmatprep.subr.mxu0 0.0
    %795 = vmatpush1.msra.mxu0 0.0
    %796 = vmatprep.subr.mxu0 0.0
    %797 = vmatpush1.msra.mxu0 0.0
    %798 = vmatprep.subr.mxu0 0.0
    %799 = vmatpush1.msra.mxu0 0.0
    %800 = vmatprep.subr.mxu0 0.0
    %801 = vmatpush1.msra.mxu0 0.0
    %802 = vmatprep.subr.mxu0 0.0
    %803 = vmatpush1.msra.mxu0 0.0
    %804 = vmatprep.mubr.f32.mxu0 0.0
    %v805 = vand.u32 %v723, 4294901760
    %v806 = vsub.f32 %v723, %v805
    %v807 = vand.u32 %v806, 4294901760
    %v808 = vsub.f32 %v806, %v807
    %v809 = vand.u32 %v808, 4294901760
    %810 = vmatmul.mubr.f32.gmra.mrb[0].mxu0 %v809
    %v811 = vpop.f32.mrb[0].mxu0
    %v812 = vadd.f32 1e-12, %v811
    %v813 = vpop.f32.mrb[0].mxu0
    %814 = vdwg.mxu0
    %815 = vmatprep.subr.mxu0 0.0
    %v816 = vand.u32 %v65, 4294901760
    %v817 = vsub.f32 %v65, %v816
    %v818 = vand.u32 %v817, 4294901760
    %v819 = vsub.f32 %v817, %v818
    %v820 = vand.u32 %v819, 4294901760
    %821 = vmatpush1.msra.mxu0 %v820
    %822 = vmatprep.subr.mxu0 0.0
    %v823 = vand.u32 %v66, 4294901760
    %v824 = vsub.f32 %v66, %v823
    %v825 = vand.u32 %v824, 4294901760
    %v826 = vsub.f32 %v824, %v825
    %v827 = vand.u32 %v826, 4294901760
    %828 = vmatpush1.msra.mxu0 %v827
    %829 = vmatprep.subr.mxu0 0.0
    %v830 = vand.u32 %v67, 4294901760
    %v831 = vsub.f32 %v67, %v830
    %v832 = vand.u32 %v831, 4294901760
    %v833 = vsub.f32 %v831, %v832
    %v834 = vand.u32 %v833, 4294901760
    %835 = vmatpush1.msra.mxu0 %v834
    %836 = vmatprep.subr.mxu0 0.0
    %v837 = vand.u32 %v68, 4294901760
    %v838 = vsub.f32 %v68, %v837
    %v839 = vand.u32 %v838, 4294901760
    %v840 = vsub.f32 %v838, %v839
    %v841 = vand.u32 %v840, 4294901760
    %842 = vmatpush1.msra.mxu0 %v841
    %843 = vmatprep.subr.mxu0 0.0
    %v844 = vand.u32 %v69, 4294901760
    %v845 = vsub.f32 %v69, %v844
    %v846 = vand.u32 %v845, 4294901760
    %v847 = vsub.f32 %v845, %v846
    %v848 = vand.u32 %v847, 4294901760
    %849 = vmatpush1.msra.mxu0 %v848
    %850 = vmatprep.subr.mxu0 0.0
    %v851 = vand.u32 %v70, 4294901760
    %v852 = vsub.f32 %v70, %v851
    %v853 = vand.u32 %v852, 4294901760
    %v854 = vsub.f32 %v852, %v853
    %v855 = vand.u32 %v854, 4294901760
    %856 = vmatpush1.msra.mxu0 %v855
    %857 = vmatprep.subr.mxu0 0.0
    %v858 = vand.u32 %v71, 4294901760
    %v859 = vsub.f32 %v71, %v858
    %v860 = vand.u32 %v859, 4294901760
    %v861 = vsub.f32 %v859, %v860
    %v862 = vand.u32 %v861, 4294901760
    %863 = vmatpush1.msra.mxu0 %v862
    %864 = vmatprep.subr.mxu0 0.0
    %v865 = vand.u32 %v72, 4294901760
    %v866 = vsub.f32 %v72, %v865
    %v867 = vand.u32 %v866, 4294901760
    %v868 = vsub.f32 %v866, %v867
    %v869 = vand.u32 %v868, 4294901760
    %870 = vmatpush1.msra.mxu0 %v869
    %871 = vmatprep.subr.mxu0 0.0
    %v872 = vand.u32 %v73, 4294901760
    %v873 = vsub.f32 %v73, %v872
    %v874 = vand.u32 %v873, 4294901760
    %v875 = vsub.f32 %v873, %v874
    %v876 = vand.u32 %v875, 4294901760
    %877 = vmatpush1.msra.mxu0 %v876
    %878 = vmatprep.subr.mxu0 0.0
    %v879 = vand.u32 %v74, 4294901760
    %v880 = vsub.f32 %v74, %v879
    %v881 = vand.u32 %v880, 4294901760
    %v882 = vsub.f32 %v880, %v881
    %v883 = vand.u32 %v882, 4294901760
    %884 = vmatpush1.msra.mxu0 %v883
    %885 = vmatprep.subr.mxu0 0.0
    %v886 = vand.u32 %v75, 4294901760
    %v887 = vsub.f32 %v75, %v886
    %v888 = vand.u32 %v887, 4294901760
    %v889 = vsub.f32 %v887, %v888
    %v890 = vand.u32 %v889, 4294901760
    %891 = vmatpush1.msra.mxu0 %v890
    %892 = vmatprep.subr.mxu0 0.0
    %v893 = vand.u32 %v76, 4294901760
    %v894 = vsub.f32 %v76, %v893
    %v895 = vand.u32 %v894, 4294901760
    %v896 = vsub.f32 %v894, %v895
    %v897 = vand.u32 %v896, 4294901760
    %898 = vmatpush1.msra.mxu0 %v897
    %899 = vmatprep.subr.mxu0 0.0
    %v900 = vand.u32 %v77, 4294901760
    %v901 = vsub.f32 %v77, %v900
    %v902 = vand.u32 %v901, 4294901760
    %v903 = vsub.f32 %v901, %v902
    %v904 = vand.u32 %v903, 4294901760
    %905 = vmatpush1.msra.mxu0 %v904
    %906 = vmatprep.subr.mxu0 0.0
    %v907 = vand.u32 %v78, 4294901760
    %v908 = vsub.f32 %v78, %v907
    %v909 = vand.u32 %v908, 4294901760
    %v910 = vsub.f32 %v908, %v909
    %v911 = vand.u32 %v910, 4294901760
    %912 = vmatpush1.msra.mxu0 %v911
    %913 = vmatprep.subr.mxu0 0.0
    %v914 = vand.u32 %v79, 4294901760
    %v915 = vsub.f32 %v79, %v914
    %v916 = vand.u32 %v915, 4294901760
    %v917 = vsub.f32 %v915, %v916
    %v918 = vand.u32 %v917, 4294901760
    %919 = vmatpush1.msra.mxu0 %v918
    %920 = vmatprep.subr.mxu0 0.0
    %v921 = vand.u32 %v80, 4294901760
    %v922 = vsub.f32 %v80, %v921
    %v923 = vand.u32 %v922, 4294901760
    %v924 = vsub.f32 %v922, %v923
    %v925 = vand.u32 %v924, 4294901760
    %926 = vmatpush1.msra.mxu0 %v925
    %927 = vmatprep.subr.mxu0 0.0
    %928 = vmatpush1.msra.mxu0 0.0
    %929 = vmatprep.subr.mxu0 0.0
    %930 = vmatpush1.msra.mxu0 0.0
    %931 = vmatprep.subr.mxu0 0.0
    %932 = vmatpush1.msra.mxu0 0.0
    %933 = vmatprep.subr.mxu0 0.0
    %934 = vmatpush1.msra.mxu0 0.0
    %935 = vmatprep.subr.mxu0 0.0
    %936 = vmatpush1.msra.mxu0 0.0
    %937 = vmatprep.subr.mxu0 0.0
    %938 = vmatpush1.msra.mxu0 0.0
    %939 = vmatprep.subr.mxu0 0.0
    %940 = vmatpush1.msra.mxu0 0.0
    %941 = vmatprep.subr.mxu0 0.0
    %942 = vmatpush1.msra.mxu0 0.0
    %943 = vmatprep.subr.mxu0 0.0
    %944 = vmatpush1.msra.mxu0 0.0
    %945 = vmatprep.subr.mxu0 0.0
    %946 = vmatpush1.msra.mxu0 0.0
    %947 = vmatprep.subr.mxu0 0.0
    %948 = vmatpush1.msra.mxu0 0.0
    %949 = vmatprep.subr.mxu0 0.0
    %950 = vmatpush1.msra.mxu0 0.0
    %951 = vmatprep.subr.mxu0 0.0
    %952 = vmatpush1.msra.mxu0 0.0
    %953 = vmatprep.subr.mxu0 0.0
    %954 = vmatpush1.msra.mxu0 0.0
    %955 = vmatprep.subr.mxu0 0.0
    %956 = vmatpush1.msra.mxu0 0.0
    %957 = vmatprep.subr.mxu0 0.0
    %958 = vmatpush1.msra.mxu0 0.0
    %959 = vmatprep.mubr.f32.mxu0 0.0
    %v960 = vand.u32 %v723, 4294901760
    %961 = vmatmul.mubr.f32.gmra.mrb[0].mxu0 %v960
    %v962 = vpop.f32.mrb[0].mxu0
    %v963 = vadd.f32 %v812, %v962
    %v964 = vpop.f32.mrb[0].mxu0
    %965 = vdwg.mxu0
    %966 = vmatprep.subr.mxu0 0.0
    %v967 = vand.u32 %v65, 4294901760
    %v968 = vsub.f32 %v65, %v967
    %969 = vmatpush1.msra.mxu0 %v968
    %970 = vmatprep.subr.mxu0 0.0
    %v971 = vand.u32 %v66, 4294901760
    %v972 = vsub.f32 %v66, %v971
    %973 = vmatpush1.msra.mxu0 %v972
    %974 = vmatprep.subr.mxu0 0.0
    %v975 = vand.u32 %v67, 4294901760
    %v976 = vsub.f32 %v67, %v975
    %977 = vmatpush1.msra.mxu0 %v976
    %978 = vmatprep.subr.mxu0 0.0
    %v979 = vand.u32 %v68, 4294901760
    %v980 = vsub.f32 %v68, %v979
    %981 = vmatpush1.msra.mxu0 %v980
    %982 = vmatprep.subr.mxu0 0.0
    %v983 = vand.u32 %v69, 4294901760
    %v984 = vsub.f32 %v69, %v983
    %985 = vmatpush1.msra.mxu0 %v984
    %986 = vmatprep.subr.mxu0 0.0
    %v987 = vand.u32 %v70, 4294901760
    %v988 = vsub.f32 %v70, %v987
    %989 = vmatpush1.msra.mxu0 %v988
    %990 = vmatprep.subr.mxu0 0.0
    %v991 = vand.u32 %v71, 4294901760
    %v992 = vsub.f32 %v71, %v991
    %993 = vmatpush1.msra.mxu0 %v992
    %994 = vmatprep.subr.mxu0 0.0
    %v995 = vand.u32 %v72, 4294901760
    %v996 = vsub.f32 %v72, %v995
    %997 = vmatpush1.msra.mxu0 %v996
    %998 = vmatprep.subr.mxu0 0.0
    %v999 = vand.u32 %v73, 4294901760
    %v1000 = vsub.f32 %v73, %v999
    %1001 = vmatpush1.msra.mxu0 %v1000
    %1002 = vmatprep.subr.mxu0 0.0
    %v1003 = vand.u32 %v74, 4294901760
    %v1004 = vsub.f32 %v74, %v1003
    %1005 = vmatpush1.msra.mxu0 %v1004
    %1006 = vmatprep.subr.mxu0 0.0
    %v1007 = vand.u32 %v75, 4294901760
    %v1008 = vsub.f32 %v75, %v1007
    %1009 = vmatpush1.msra.mxu0 %v1008
    %1010 = vmatprep.subr.mxu0 0.0
    %v1011 = vand.u32 %v76, 4294901760
    %v1012 = vsub.f32 %v76, %v1011
    %1013 = vmatpush1.msra.mxu0 %v1012
    %1014 = vmatprep.subr.mxu0 0.0
    %v1015 = vand.u32 %v77, 4294901760
    %v1016 = vsub.f32 %v77, %v1015
    %1017 = vmatpush1.msra.mxu0 %v1016
    %1018 = vmatprep.subr.mxu0 0.0
    %v1019 = vand.u32 %v78, 4294901760
    %v1020 = vsub.f32 %v78, %v1019
    %1021 = vmatpush1.msra.mxu0 %v1020
    %1022 = vmatprep.subr.mxu0 0.0
    %v1023 = vand.u32 %v79, 4294901760
    %v1024 = vsub.f32 %v79, %v1023
    %1025 = vmatpush1.msra.mxu0 %v1024
    %1026 = vmatprep.subr.mxu0 0.0
    %v1027 = vand.u32 %v80, 4294901760
    %v1028 = vsub.f32 %v80, %v1027
    %1029 = vmatpush1.msra.mxu0 %v1028
    %1030 = vmatprep.subr.mxu0 0.0
    %1031 = vmatpush1.msra.mxu0 0.0
    %1032 = vmatprep.subr.mxu0 0.0
    %1033 = vmatpush1.msra.mxu0 0.0
    %1034 = vmatprep.subr.mxu0 0.0
    %1035 = vmatpush1.msra.mxu0 0.0
    %1036 = vmatprep.subr.mxu0 0.0
    %1037 = vmatpush1.msra.mxu0 0.0
    %1038 = vmatprep.subr.mxu0 0.0
    %1039 = vmatpush1.msra.mxu0 0.0
    %1040 = vmatprep.subr.mxu0 0.0
    %1041 = vmatpush1.msra.mxu0 0.0
    %1042 = vmatprep.subr.mxu0 0.0
    %1043 = vmatpush1.msra.mxu0 0.0
    %1044 = vmatprep.subr.mxu0 0.0
    %1045 = vmatpush1.msra.mxu0 0.0
    %1046 = vmatprep.subr.mxu0 0.0
    %1047 = vmatpush1.msra.mxu0 0.0
    %1048 = vmatprep.subr.mxu0 0.0
    %1049 = vmatpush1.msra.mxu0 0.0
    %1050 = vmatprep.subr.mxu0 0.0
    %1051 = vmatpush1.msra.mxu0 0.0
    %1052 = vmatprep.subr.mxu0 0.0
    %1053 = vmatpush1.msra.mxu0 0.0
    %1054 = vmatprep.subr.mxu0 0.0
    %1055 = vmatpush1.msra.mxu0 0.0
    %1056 = vmatprep.subr.mxu0 0.0
    %1057 = vmatpush1.msra.mxu0 0.0
    %1058 = vmatprep.subr.mxu0 0.0
    %1059 = vmatpush1.msra.mxu0 0.0
    %1060 = vmatprep.subr.mxu0 0.0
    %1061 = vmatpush1.msra.mxu0 0.0
    %1062 = vmatprep.mubr.f32.mxu0 0.0
    %v1063 = vand.u32 %v723, 4294901760
    %v1064 = vsub.f32 %v723, %v1063
    %1065 = vmatmul.mubr.f32.gmra.mrb[0].mxu0 %v1064
    %v1066 = vpop.f32.mrb[0].mxu0
    %v1067 = vadd.f32 %v963, %v1066
    %v1068 = vpop.f32.mrb[0].mxu0
    %1069 = vdwg.mxu0
    %1070 = vmatprep.subr.mxu0 0.0
    %v1071 = vand.u32 %v65, 4294901760
    %1072 = vmatpush1.msra.mxu0 %v1071
    %1073 = vmatprep.subr.mxu0 0.0
    %v1074 = vand.u32 %v66, 4294901760
    %1075 = vmatpush1.msra.mxu0 %v1074
    %1076 = vmatprep.subr.mxu0 0.0
    %v1077 = vand.u32 %v67, 4294901760
    %1078 = vmatpush1.msra.mxu0 %v1077
    %1079 = vmatprep.subr.mxu0 0.0
    %v1080 = vand.u32 %v68, 4294901760
    %1081 = vmatpush1.msra.mxu0 %v1080
    %1082 = vmatprep.subr.mxu0 0.0
    %v1083 = vand.u32 %v69, 4294901760
    %1084 = vmatpush1.msra.mxu0 %v1083
    %1085 = vmatprep.subr.mxu0 0.0
    %v1086 = vand.u32 %v70, 4294901760
    %1087 = vmatpush1.msra.mxu0 %v1086
    %1088 = vmatprep.subr.mxu0 0.0
    %v1089 = vand.u32 %v71, 4294901760
    %1090 = vmatpush1.msra.mxu0 %v1089
    %1091 = vmatprep.subr.mxu0 0.0
    %v1092 = vand.u32 %v72, 4294901760
    %1093 = vmatpush1.msra.mxu0 %v1092
    %1094 = vmatprep.subr.mxu0 0.0
    %v1095 = vand.u32 %v73, 4294901760
    %1096 = vmatpush1.msra.mxu0 %v1095
    %1097 = vmatprep.subr.mxu0 0.0
    %v1098 = vand.u32 %v74, 4294901760
    %1099 = vmatpush1.msra.mxu0 %v1098
    %1100 = vmatprep.subr.mxu0 0.0
    %v1101 = vand.u32 %v75, 4294901760
    %1102 = vmatpush1.msra.mxu0 %v1101
    %1103 = vmatprep.subr.mxu0 0.0
    %v1104 = vand.u32 %v76, 4294901760
    %1105 = vmatpush1.msra.mxu0 %v1104
    %1106 = vmatprep.subr.mxu0 0.0
    %v1107 = vand.u32 %v77, 4294901760
    %1108 = vmatpush1.msra.mxu0 %v1107
    %1109 = vmatprep.subr.mxu0 0.0
    %v1110 = vand.u32 %v78, 4294901760
    %1111 = vmatpush1.msra.mxu0 %v1110
    %1112 = vmatprep.subr.mxu0 0.0
    %v1113 = vand.u32 %v79, 4294901760
    %1114 = vmatpush1.msra.mxu0 %v1113
    %1115 = vmatprep.subr.mxu0 0.0
    %v1116 = vand.u32 %v80, 4294901760
    %1117 = vmatpush1.msra.mxu0 %v1116
    %1118 = vmatprep.subr.mxu0 0.0
    %1119 = vmatpush1.msra.mxu0 0.0
    %1120 = vmatprep.subr.mxu0 0.0
    %1121 = vmatpush1.msra.mxu0 0.0
    %1122 = vmatprep.subr.mxu0 0.0
    %1123 = vmatpush1.msra.mxu0 0.0
    %1124 = vmatprep.subr.mxu0 0.0
    %1125 = vmatpush1.msra.mxu0 0.0
    %1126 = vmatprep.subr.mxu0 0.0
    %1127 = vmatpush1.msra.mxu0 0.0
    %1128 = vmatprep.subr.mxu0 0.0
    %1129 = vmatpush1.msra.mxu0 0.0
    %1130 = vmatprep.subr.mxu0 0.0
    %1131 = vmatpush1.msra.mxu0 0.0
    %1132 = vmatprep.subr.mxu0 0.0
    %1133 = vmatpush1.msra.mxu0 0.0
    %1134 = vmatprep.subr.mxu0 0.0
    %1135 = vmatpush1.msra.mxu0 0.0
    %1136 = vmatprep.subr.mxu0 0.0
    %1137 = vmatpush1.msra.mxu0 0.0
    %1138 = vmatprep.subr.mxu0 0.0
    %1139 = vmatpush1.msra.mxu0 0.0
    %1140 = vmatprep.subr.mxu0 0.0
    %1141 = vmatpush1.msra.mxu0 0.0
    %1142 = vmatprep.subr.mxu0 0.0
    %1143 = vmatpush1.msra.mxu0 0.0
    %1144 = vmatprep.subr.mxu0 0.0
    %1145 = vmatpush1.msra.mxu0 0.0
    %1146 = vmatprep.subr.mxu0 0.0
    %1147 = vmatpush1.msra.mxu0 0.0
    %1148 = vmatprep.subr.mxu0 0.0
    %1149 = vmatpush1.msra.mxu0 0.0
    %1150 = vmatprep.mubr.f32.mxu0 0.0
    %v1151 = vand.u32 %v723, 4294901760
    %v1152 = vsub.f32 %v723, %v1151
    %v1153 = vand.u32 %v1152, 4294901760
    %1154 = vmatmul.mubr.f32.gmra.mrb[0].mxu0 %v1153
    %v1155 = vpop.f32.mrb[0].mxu0
    %v1156 = vadd.f32 %v1067, %v1155
    %v1157 = vpop.f32.mrb[0].mxu0
    %1158 = vdwg.mxu0
    %1159 = vmatprep.subr.mxu0 0.0
    %v1160 = vand.u32 %v65, 4294901760
    %v1161 = vsub.f32 %v65, %v1160
    %v1162 = vand.u32 %v1161, 4294901760
    %1163 = vmatpush1.msra.mxu0 %v1162
    %1164 = vmatprep.subr.mxu0 0.0
    %v1165 = vand.u32 %v66, 4294901760
    %v1166 = vsub.f32 %v66, %v1165
    %v1167 = vand.u32 %v1166, 4294901760
    %1168 = vmatpush1.msra.mxu0 %v1167
    %1169 = vmatprep.subr.mxu0 0.0
    %v1170 = vand.u32 %v67, 4294901760
    %v1171 = vsub.f32 %v67, %v1170
    %v1172 = vand.u32 %v1171, 4294901760
    %1173 = vmatpush1.msra.mxu0 %v1172
    %1174 = vmatprep.subr.mxu0 0.0
    %v1175 = vand.u32 %v68, 4294901760
    %v1176 = vsub.f32 %v68, %v1175
    %v1177 = vand.u32 %v1176, 4294901760
    %1178 = vmatpush1.msra.mxu0 %v1177
    %1179 = vmatprep.subr.mxu0 0.0
    %v1180 = vand.u32 %v69, 4294901760
    %v1181 = vsub.f32 %v69, %v1180
    %v1182 = vand.u32 %v1181, 4294901760
    %1183 = vmatpush1.msra.mxu0 %v1182
    %1184 = vmatprep.subr.mxu0 0.0
    %v1185 = vand.u32 %v70, 4294901760
    %v1186 = vsub.f32 %v70, %v1185
    %v1187 = vand.u32 %v1186, 4294901760
    %1188 = vmatpush1.msra.mxu0 %v1187
    %1189 = vmatprep.subr.mxu0 0.0
    %v1190 = vand.u32 %v71, 4294901760
    %v1191 = vsub.f32 %v71, %v1190
    %v1192 = vand.u32 %v1191, 4294901760
    %1193 = vmatpush1.msra.mxu0 %v1192
    %1194 = vmatprep.subr.mxu0 0.0
    %v1195 = vand.u32 %v72, 4294901760
    %v1196 = vsub.f32 %v72, %v1195
    %v1197 = vand.u32 %v1196, 4294901760
    %1198 = vmatpush1.msra.mxu0 %v1197
    %1199 = vmatprep.subr.mxu0 0.0
    %v1200 = vand.u32 %v73, 4294901760
    %v1201 = vsub.f32 %v73, %v1200
    %v1202 = vand.u32 %v1201, 4294901760
    %1203 = vmatpush1.msra.mxu0 %v1202
    %1204 = vmatprep.subr.mxu0 0.0
    %v1205 = vand.u32 %v74, 4294901760
    %v1206 = vsub.f32 %v74, %v1205
    %v1207 = vand.u32 %v1206, 4294901760
    %1208 = vmatpush1.msra.mxu0 %v1207
    %1209 = vmatprep.subr.mxu0 0.0
    %v1210 = vand.u32 %v75, 4294901760
    %v1211 = vsub.f32 %v75, %v1210
    %v1212 = vand.u32 %v1211, 4294901760
    %1213 = vmatpush1.msra.mxu0 %v1212
    %1214 = vmatprep.subr.mxu0 0.0
    %v1215 = vand.u32 %v76, 4294901760
    %v1216 = vsub.f32 %v76, %v1215
    %v1217 = vand.u32 %v1216, 4294901760
    %1218 = vmatpush1.msra.mxu0 %v1217
    %1219 = vmatprep.subr.mxu0 0.0
    %v1220 = vand.u32 %v77, 4294901760
    %v1221 = vsub.f32 %v77, %v1220
    %v1222 = vand.u32 %v1221, 4294901760
    %1223 = vmatpush1.msra.mxu0 %v1222
    %1224 = vmatprep.subr.mxu0 0.0
    %v1225 = vand.u32 %v78, 4294901760
    %v1226 = vsub.f32 %v78, %v1225
    %v1227 = vand.u32 %v1226, 4294901760
    %1228 = vmatpush1.msra.mxu0 %v1227
    %1229 = vmatprep.subr.mxu0 0.0
    %v1230 = vand.u32 %v79, 4294901760
    %v1231 = vsub.f32 %v79, %v1230
    %v1232 = vand.u32 %v1231, 4294901760
    %1233 = vmatpush1.msra.mxu0 %v1232
    %1234 = vmatprep.subr.mxu0 0.0
    %v1235 = vand.u32 %v80, 4294901760
    %v1236 = vsub.f32 %v80, %v1235
    %v1237 = vand.u32 %v1236, 4294901760
    %1238 = vmatpush1.msra.mxu0 %v1237
    %1239 = vmatprep.subr.mxu0 0.0
    %1240 = vmatpush1.msra.mxu0 0.0
    %1241 = vmatprep.subr.mxu0 0.0
    %1242 = vmatpush1.msra.mxu0 0.0
    %1243 = vmatprep.subr.mxu0 0.0
    %1244 = vmatpush1.msra.mxu0 0.0
    %1245 = vmatprep.subr.mxu0 0.0
    %1246 = vmatpush1.msra.mxu0 0.0
    %1247 = vmatprep.subr.mxu0 0.0
    %1248 = vmatpush1.msra.mxu0 0.0
    %1249 = vmatprep.subr.mxu0 0.0
    %1250 = vmatpush1.msra.mxu0 0.0
    %1251 = vmatprep.subr.mxu0 0.0
    %1252 = vmatpush1.msra.mxu0 0.0
    %1253 = vmatprep.subr.mxu0 0.0
    %1254 = vmatpush1.msra.mxu0 0.0
    %1255 = vmatprep.subr.mxu0 0.0
    %1256 = vmatpush1.msra.mxu0 0.0
    %1257 = vmatprep.subr.mxu0 0.0
    %1258 = vmatpush1.msra.mxu0 0.0
    %1259 = vmatprep.subr.mxu0 0.0
    %1260 = vmatpush1.msra.mxu0 0.0
    %1261 = vmatprep.subr.mxu0 0.0
    %1262 = vmatpush1.msra.mxu0 0.0
    %1263 = vmatprep.subr.mxu0 0.0
    %1264 = vmatpush1.msra.mxu0 0.0
    %1265 = vmatprep.subr.mxu0 0.0
    %1266 = vmatpush1.msra.mxu0 0.0
    %1267 = vmatprep.subr.mxu0 0.0
    %1268 = vmatpush1.msra.mxu0 0.0
    %1269 = vmatprep.subr.mxu0 0.0
    %1270 = vmatpush1.msra.mxu0 0.0
    %1271 = vmatprep.mubr.f32.mxu0 0.0
    %v1272 = vand.u32 %v723, 4294901760
    %1273 = vmatmul.mubr.f32.gmra.mrb[0].mxu0 %v1272
    %v1274 = vpop.f32.mrb[0].mxu0
    %v1275 = vadd.f32 %v1156, %v1274
    %v1276 = vpop.f32.mrb[0].mxu0
    %1277 = vdwg.mxu0
    %1278 = vmatprep.subr.mxu0 0.0
    %v1279 = vand.u32 %v65, 4294901760
    %1280 = vmatpush1.msra.mxu0 %v1279
    %1281 = vmatprep.subr.mxu0 0.0
    %v1282 = vand.u32 %v66, 4294901760
    %1283 = vmatpush1.msra.mxu0 %v1282
    %1284 = vmatprep.subr.mxu0 0.0
    %v1285 = vand.u32 %v67, 4294901760
    %1286 = vmatpush1.msra.mxu0 %v1285
    %1287 = vmatprep.subr.mxu0 0.0
    %v1288 = vand.u32 %v68, 4294901760
    %1289 = vmatpush1.msra.mxu0 %v1288
    %1290 = vmatprep.subr.mxu0 0.0
    %v1291 = vand.u32 %v69, 4294901760
    %1292 = vmatpush1.msra.mxu0 %v1291
    %1293 = vmatprep.subr.mxu0 0.0
    %v1294 = vand.u32 %v70, 4294901760
    %1295 = vmatpush1.msra.mxu0 %v1294
    %1296 = vmatprep.subr.mxu0 0.0
    %v1297 = vand.u32 %v71, 4294901760
    %1298 = vmatpush1.msra.mxu0 %v1297
    %1299 = vmatprep.subr.mxu0 0.0
    %v1300 = vand.u32 %v72, 4294901760
    %1301 = vmatpush1.msra.mxu0 %v1300
    %1302 = vmatprep.subr.mxu0 0.0
    %v1303 = vand.u32 %v73, 4294901760
    %1304 = vmatpush1.msra.mxu0 %v1303
    %1305 = vmatprep.subr.mxu0 0.0
    %v1306 = vand.u32 %v74, 4294901760
    %1307 = vmatpush1.msra.mxu0 %v1306
    %1308 = vmatprep.subr.mxu0 0.0
    %v1309 = vand.u32 %v75, 4294901760
    %1310 = vmatpush1.msra.mxu0 %v1309
    %1311 = vmatprep.subr.mxu0 0.0
    %v1312 = vand.u32 %v76, 4294901760
    %1313 = vmatpush1.msra.mxu0 %v1312
    %1314 = vmatprep.subr.mxu0 0.0
    %v1315 = vand.u32 %v77, 4294901760
    %1316 = vmatpush1.msra.mxu0 %v1315
    %1317 = vmatprep.subr.mxu0 0.0
    %v1318 = vand.u32 %v78, 4294901760
    %1319 = vmatpush1.msra.mxu0 %v1318
    %1320 = vmatprep.subr.mxu0 0.0
    %v1321 = vand.u32 %v79, 4294901760
    %1322 = vmatpush1.msra.mxu0 %v1321
    %1323 = vmatprep.subr.mxu0 0.0
    %v1324 = vand.u32 %v80, 4294901760
    %1325 = vmatpush1.msra.mxu0 %v1324
    %1326 = vmatprep.subr.mxu0 0.0
    %1327 = vmatpush1.msra.mxu0 0.0
    %1328 = vmatprep.subr.mxu0 0.0
    %1329 = vmatpush1.msra.mxu0 0.0
    %1330 = vmatprep.subr.mxu0 0.0
    %1331 = vmatpush1.msra.mxu0 0.0
    %1332 = vmatprep.subr.mxu0 0.0
    %1333 = vmatpush1.msra.mxu0 0.0
    %1334 = vmatprep.subr.mxu0 0.0
    %1335 = vmatpush1.msra.mxu0 0.0
    %1336 = vmatprep.subr.mxu0 0.0
    %1337 = vmatpush1.msra.mxu0 0.0
    %1338 = vmatprep.subr.mxu0 0.0
    %1339 = vmatpush1.msra.mxu0 0.0
    %1340 = vmatprep.subr.mxu0 0.0
    %1341 = vmatpush1.msra.mxu0 0.0
    %1342 = vmatprep.subr.mxu0 0.0
    %1343 = vmatpush1.msra.mxu0 0.0
    %1344 = vmatprep.subr.mxu0 0.0
    %1345 = vmatpush1.msra.mxu0 0.0
    %1346 = vmatprep.subr.mxu0 0.0
    %1347 = vmatpush1.msra.mxu0 0.0
    %1348 = vmatprep.subr.mxu0 0.0
    %1349 = vmatpush1.msra.mxu0 0.0
    %1350 = vmatprep.subr.mxu0 0.0
    %1351 = vmatpush1.msra.mxu0 0.0
    %1352 = vmatprep.subr.mxu0 0.0
    %1353 = vmatpush1.msra.mxu0 0.0
    %1354 = vmatprep.subr.mxu0 0.0
    %1355 = vmatpush1.msra.mxu0 0.0
    %1356 = vmatprep.subr.mxu0 0.0
    %1357 = vmatpush1.msra.mxu0 0.0
    %1358 = vmatprep.mubr.f32.mxu0 0.0
    %v1359 = vand.u32 %v723, 4294901760
    %1360 = vmatmul.mubr.f32.gmra.mrb[0].mxu0 %v1359
    %v1361 = vpop.f32.mrb[0].mxu0
    %v1362 = vadd.f32 %v1275, %v1361
    %v1363 = vpop.f32.mrb[0].mxu0
    %1364 = vdwg.mxu0
    %v1365 = vrsqrt.pop %v1362
    %v1366 = vmul.f32 %v722, %v1365
    %v1367 = vld [vmem:[%s2] sm:$0x1]
    %v1369 = vlaneseq
    %v1370 = vshrl.u32 %v1369, 7
    %v1371 = vsub.s32 0, %v1370
    %v1372 = vrot.slane %v1367, %v1371
    %v1374 = vmul.f32 %v1366, %v1372
    %v1375 = vld [vmem:[%s3] sm:$0x1]
    %v1377 = vlaneseq
    %v1378 = vshrl.u32 %v1377, 7
    %v1379 = vsub.s32 0, %v1378
    %v1380 = vrot.slane %v1375, %v1379
    %v1382 = vadd.f32 %v1374, %v1380
    %1383 = vst [vmem:[#allocation8] sm:$0xff] %v1382
    // Predicated region
    $region34: #{tpu_custom_call.1} parent=1 // pred_check
      _
    $region35: #{tpu_custom_call.1} parent=1 // pred_check_branch
      %1385 = sbr.rel (0) target = $region37
    $region36: #{tpu_custom_call.1} parent=1 // pred_region
      %s1387 = ssub.s32 128, 64
      %1388 = vsyncadd [#allocation4], %s1387
      %s1389 = sshll.u32 [#allocation8], 4
      %s1390 = int_to_ptr.vmem [resolvable:$true] %s1389
      %1395 = dma.vmem_to_hbm [thread:$0]  %s1390, 64, %s5, [#allocation4], 64, 64, 4
    $region37: #{tpu_custom_call.1} parent=1 // pred_fallthru
      _
    // Predicated region
    $region38: #{tpu_custom_call.1} parent=1 // pred_check
      _
    $region39: #{tpu_custom_call.1} parent=1 // pred_check_branch
      %1397 = sbr.rel (0) target = $region41
    $region40: #{tpu_custom_call.1} parent=1 // pred_region
      %1398 = dma.done [#allocation4], 128
    $region41: #{tpu_custom_call.1} parent=1 // pred_fallthru
      _
    %1399 = vsyncpa [#allocation3], 1
    %1400 = vsyncpa [#allocation6], 1
    %1401 = vsyncpa [#allocation4], 1

</llo_original>
